<compile_context>
chip_gen: v7x
topology: tpu7x:2x2x1
jax: 0.10.0
libtpu: 0.0.40
codegen_flags: <defaults>
</compile_context>

<pallas_src>
import math
import functools

import jax
import jax.numpy as jnp
from jax.experimental import pallas as pl
from jax.experimental.pallas import tpu as pltpu


def _softplus(x):
    # Numerically stable log(1 + exp(x)), matching F.softplus (beta=1).
    return jnp.maximum(x, 0.0) + jnp.log(1.0 + jnp.exp(-jnp.abs(x)))


def _apply_act(z, activation):
    if activation == "relu":
        return jnp.maximum(z, 0.0)
    return z  # 'none' (softmax is applied on the sliced output in the wrapper)


# --------------------------------------------------------------------------
# Kernels
# --------------------------------------------------------------------------
def _bnn_map_kernel(x_ref, wm_ref, bm_ref, out_ref, *, activation):
    """MAP mode: out = act(X @ W_mean + b_mean).  Accumulates directly into
    the resident f32 output block (no scratch)."""
    k = pl.program_id(1)
    last = pl.num_programs(1) - 1

    @pl.when(k == 0)
    def _init():
        out_ref[...] = jnp.zeros_like(out_ref)

    out_ref[...] += jnp.dot(x_ref[...], wm_ref[...].astype(jnp.float32),
                            preferred_element_type=jnp.float32)

    @pl.when(k == last)
    def _finalize():
        out_ref[...] = _apply_act(out_ref[...] + bm_ref[...], activation)


def _bnn_sample_kernel(x_ref, wm_ref, wr_ref, bm_ref, br_ref, noise_ref,
                       *refs, compute_kl, activation, prior_var,
                       rho_is_sigma2, mask_cols, n_valid, tn, n_samples):
    """'MC' (compute_kl=False) and 'forward' (compute_kl=True) modes.
    noise_ref / out_ref carry n_samples MC samples sharing one weight pass."""
    if compute_kl:
        out_ref, kl_ref, zm_acc, zv_acc, xs_acc = refs
    else:
        out_ref, zm_acc, zv_acc = refs
        kl_ref = xs_acc = None

    k = pl.program_id(1)
    last = pl.num_programs(1) - 1

    # Column-validity mask for padded N columns.  IMPORTANT: program_id / iota
    # are evaluated at the kernel top level (never inside a pl.when body) and
    # only captured by the closures below.
    if mask_cols:
        j = pl.program_id(0)
        col = j * tn + jax.lax.broadcasted_iota(jnp.int32, (1, tn), 1)
        valid = col < n_valid
    else:
        valid = None

    @pl.when(k == 0)
    def _init():
        zm_acc[...] = jnp.zeros_like(zm_acc)
        zv_acc[...] = jnp.zeros_like(zv_acc)
        if compute_kl:
            xs_acc[...] = jnp.zeros_like(xs_acc)

    x = x_ref[...]
    x2 = x * x                                   # per-K-tile, short live range
    wm = wm_ref[...].astype(jnp.float32)         # bf16 stream -> f32 compute
    wr = wr_ref[...].astype(jnp.float32)
    if rho_is_sigma2:
        w_var = wr                               # cached softplus(W_rho)^2
    else:
        sp_w = _softplus(wr)
        w_var = sp_w * sp_w

    zm_acc[...] += jnp.dot(x, wm, preferred_element_type=jnp.float32)
    zv_acc[...] += jnp.dot(x2, w_var, preferred_element_type=jnp.float32)
    if compute_kl:
        xs_acc[...] += jnp.sum(x2, axis=-1, keepdims=True)   # rowsum(x^2)

    @pl.when(k == last)
    def _finalize():
        if rho_is_sigma2:
            b_var = br_ref[...].astype(jnp.float32)
        else:
            sp_b = _softplus(br_ref[...])
            b_var = sp_b * sp_b
        z_mean = zm_acc[...] + bm_ref[...]                   # (B, tn)
        z_var = zv_acc[...] + b_var                          # (B, tn)
        if mask_cols:
            # Padded columns may hold z_var == 0 (cached-sigma^2 path) or
            # junk; make sqrt/log benign before the KL mask.
            z_var = jnp.where(valid, z_var, 1.0)
        z_std = jnp.sqrt(z_var)

        if compute_kl:
            # Exact rewrite of sum(log N(z; zm, zs) - log N(z; zm, ps)) with
            # z - z_mean == z_std * noise:
            #   0.5 * (log(pv) - log(zv) - n^2 + zv*n^2/pv)
            prior_z_var = prior_var * xs_acc[...] + prior_var   # (B, 1)
            inv_prior = pl.reciprocal(prior_z_var)
            log_ratio = jnp.log(prior_z_var) - jnp.log(z_var)   # (B, tn)

        for s in range(n_samples):                # static small sample loop
            noise_s = noise_ref[s]
            z = z_mean + z_std * noise_s
            out_ref[s] = _apply_act(z, activation).astype(out_ref.dtype)
            if compute_kl:
                n2 = noise_s * noise_s
                kl_elem = 0.5 * (log_ratio - n2 + z_var * n2 * inv_prior)
                if mask_cols:
                    kl_elem = jnp.where(valid, kl_elem, 0.0)
                kl_ref[0, s:s + 1, :] = jnp.full(
                    (1, 128), jnp.sum(kl_elem), jnp.float32)


# --------------------------------------------------------------------------
# Wrapper
# --------------------------------------------------------------------------
def _round_up(x, m):
    return (x + m - 1) // m * m


def _lane_tiling(n, tile_max):
    """(padded, tile, grid) for the lane/N axis.  Tile is a multiple of 128
    dividing the padded extent; prefer >= 2 tiles so the 'parallel' axis can
    shard across v7x's two TensorCores."""
    padded = _round_up(n, 128)
    tile = min(tile_max, padded)
    while padded % tile:
        tile -= 128
    if padded // tile < 2 and padded >= 256:
        t = (padded // 2) // 128 * 128
        while t >= 128 and padded % t:
            t -= 128
        if t >= 128:
            tile = t
    return padded, tile, padded // tile


def _k_tiling(n, tile_max):
    if n <= tile_max:
        return n, n, 1
    padded = _round_up(n, tile_max)
    return padded, tile_max, padded // tile_max


def _vmem_budget(nbytes):
    # Real double-buffered need + headroom; keep well under v7x's 64 MiB.
    return int(min(48 * 2**20, max(16 * 2**20, nbytes * 5 // 4 + (2 << 20))))


def bnn_layer_forward(x, w_mean, w_rho, b_mean, b_rho, noise=None, *,
                      mode, activation, prior_rho, rho_is_sigma2=False,
                      weights_dtype=jnp.bfloat16, tn_max=512, tk_max=512):
    """BNNLayer.forward.

    mode='MAP'     -> act(X @ W_mean + b_mean)
    mode='MC'      -> act(Z), Z = Z_mean + Z_std * noise
    mode='forward' -> (act(Z), KL)
    noise: (batch, n_output) or (S, batch, n_output).  With S samples the
    weight pass / matmuls are shared and S outputs (and S KLs) are returned.
    rho_is_sigma2=True -> w_rho/b_rho already hold softplus(rho)**2.
    tn_max/tk_max: 512 is v7x-safe; raise to 1024 on v5e/v6e (128 MiB VMEM).
    """
    assert mode in {"forward", "MAP", "MC"}, "BNNLayer Mode Not Found"
    assert activation in {"relu", "softmax", "none"}, "Activation Type Not Found"
    assert tn_max % 128 == 0 and tk_max % 128 == 0
    batch, n_input = x.shape
    n_output = w_mean.shape[1]

    n_pad, tn, grid_n = _lane_tiling(n_output, tn_max)
    k_pad, tk, grid_k = _k_tiling(n_input, tk_max)
    grid = (grid_n, grid_k)
    wbytes = jnp.dtype(weights_dtype).itemsize

    def pad2(a, rows, cols, dtype=jnp.float32):
        a = a.astype(dtype)
        r, c = a.shape
        if (r, c) != (rows, cols):
            a = jnp.pad(a, ((0, rows - r), (0, cols - c)))
        return a

    x_p = pad2(x, batch, k_pad)
    wm_p = pad2(w_mean, k_pad, n_pad, weights_dtype)
    bm_p = pad2(b_mean, 1, n_pad)

    x_spec = pl.BlockSpec((batch, tk), lambda j, k: (0, k))
    w_spec = pl.BlockSpec((tk, tn), lambda j, k: (k, j))
    b_spec = pl.BlockSpec((1, tn), lambda j, k: (0, j))
    out2d_spec = pl.BlockSpec((batch, tn), lambda j, k: (0, j))

    # relu / none are fused in-kernel; softmax needs the full (unpadded) row,
    # so it is applied on the sliced output in the wrapper.
    act_in_kernel = activation if activation == "relu" else "none"

    if mode == "MAP":
        need = (2 * batch * tk * 4 + 2 * tk * tn * wbytes
                + 2 * tn * 4 + 2 * batch * tn * 4)
        cost = pl.CostEstimate(
            flops=2 * batch * k_pad * n_pad, transcendentals=0,
            bytes_accessed=int(grid_n * batch * k_pad * 4
                               + k_pad * n_pad * wbytes
                               + n_pad * 4 + batch * n_pad * 4))
        out_p = pl.pallas_call(
            functools.partial(_bnn_map_kernel, activation=act_in_kernel),
            out_shape=jax.ShapeDtypeStruct((batch, n_pad), jnp.float32),
            grid_spec=pltpu.PrefetchScalarGridSpec(
                num_scalar_prefetch=0, grid=grid,
                in_specs=[x_spec, w_spec, b_spec],
                out_specs=out2d_spec),
            compiler_params=pltpu.CompilerParams(
                dimension_semantics=("parallel", "arbitrary"),
                vmem_limit_bytes=_vmem_budget(need)),
            cost_estimate=cost,
        )(x_p, wm_p, bm_p)
        out = out_p[:, :n_output]
        if activation == "softmax":
            out = jax.nn.softmax(out, axis=-1)
        return out

    assert noise is not None, "noise is required for 'forward' / 'MC' modes"
    squeeze_s = noise.ndim == 2
    noise3 = noise[None] if squeeze_s else noise
    n_samples = noise3.shape[0]
    assert noise3.shape == (n_samples, batch, n_output)
    noise_p = jnp.pad(noise3.astype(jnp.float32),
                      ((0, 0), (0, 0), (0, n_pad - n_output)))

    prior_var = float(math.log(1.0 + math.exp(prior_rho)) ** 2)
    wr_p = pad2(w_rho, k_pad, n_pad, weights_dtype)
    br_p = pad2(b_rho, 1, n_pad)

    compute_kl = mode == "forward"
    mask_cols = n_pad != n_output

    noise_spec = pl.BlockSpec((n_samples, batch, tn), lambda j, k: (0, 0, j))
    out3d_spec = pl.BlockSpec((n_samples, batch, tn), lambda j, k: (0, 0, j))

    kernel = functools.partial(
        _bnn_sample_kernel, compute_kl=compute_kl, activation=act_in_kernel,
        prior_var=prior_var, rho_is_sigma2=rho_is_sigma2,
        mask_cols=mask_cols, n_valid=n_output, tn=tn, n_samples=n_samples)

    scratch = [pltpu.VMEM((batch, tn), jnp.float32),    # z_mean accumulator
               pltpu.VMEM((batch, tn), jnp.float32)]    # z_var accumulator
    if compute_kl:
        out_shape = (jax.ShapeDtypeStruct((n_samples, batch, n_pad), jnp.float32),
                     jax.ShapeDtypeStruct((grid_n, n_samples, 128), jnp.float32))
        out_specs = (out3d_spec,
                     pl.BlockSpec((1, n_samples, 128), lambda j, k: (j, 0, 0)))
        scratch.append(pltpu.VMEM((batch, 1), jnp.float32))   # rowsum(x^2)
    else:
        out_shape = jax.ShapeDtypeStruct((n_samples, batch, n_pad), jnp.float32)
        out_specs = out3d_spec

    need = (2 * batch * tk * 4 + 4 * tk * tn * wbytes + 4 * tn * 4
            + 4 * n_samples * batch * tn * 4 + 2 * batch * tn * 4
            + batch * 4 + 2 * n_samples * 128 * 4)
    trans = (0 if rho_is_sigma2 else 2 * k_pad * n_pad) + 4 * batch * n_pad
    cost = pl.CostEstimate(
        flops=4 * batch * k_pad * n_pad + 10 * n_samples * batch * n_pad,
        transcendentals=int(trans),
        bytes_accessed=int(grid_n * batch * k_pad * 4
                           + 2 * k_pad * n_pad * wbytes + 2 * n_pad * 4
                           + 2 * n_samples * batch * n_pad * 4
                           + (grid_n * n_samples * 128 * 4 if compute_kl else 0)))

    result = pl.pallas_call(
        kernel, out_shape=out_shape,
        grid_spec=pltpu.PrefetchScalarGridSpec(
            num_scalar_prefetch=0, grid=grid,
            in_specs=[x_spec, w_spec, w_spec, b_spec, b_spec, noise_spec],
            out_specs=out_specs, scratch_shapes=scratch),
        compiler_params=pltpu.CompilerParams(
            dimension_semantics=("parallel", "arbitrary"),
            vmem_limit_bytes=_vmem_budget(need)),
        cost_estimate=cost,
    )(x_p, wm_p, wr_p, bm_p, br_p, noise_p)

    if compute_kl:
        out_p, kl_part = result
        kl = jnp.sum(kl_part[:, :, 0], axis=0)            # (S,)
    else:
        out_p = result

    out = out_p[:, :, :n_output]
    if activation == "softmax":
        out = jax.nn.softmax(out, axis=-1)
    if squeeze_s:
        out = out[0]
        return (out, kl[0]) if compute_kl else out
    return (out, kl) if compute_kl else out


# --------------------------------------------------------------------------
# Pure-JAX reference ('forward' mode, relu activation) for checking.
# --------------------------------------------------------------------------
def _reference(x, w_mean, w_rho, b_mean, b_rho, noise, prior_rho):
    prior_var = math.log(1.0 + math.exp(prior_rho)) ** 2
    z_mean = x @ w_mean + b_mean
    sp_w = jax.nn.softplus(w_rho)
    sp_b = jax.nn.softplus(b_rho)
    z_std = jnp.sqrt((x ** 2) @ (sp_w ** 2) + sp_b ** 2)
    z = z_mean + z_std * noise
    prior_std = jnp.sqrt((x ** 2) @ (jnp.ones_like(w_mean) * prior_var)
                         + prior_var)
    log_p1 = -jnp.log(z_std) - 0.5 * (z - z_mean) ** 2 / z_std ** 2
    log_p2 = -jnp.log(prior_std) - 0.5 * (z - z_mean) ** 2 / prior_std ** 2
    kl = jnp.sum(log_p1 - log_p2)
    return jnp.maximum(z, 0.0), kl


if __name__ == "__main__":
    batch, n_input, n_output = 8, 256, 384
    prior_mean, prior_rho = 0.0, -3.0
    activation = "relu"

    def bf16_exact(a):
        # Round values to bf16-representable numbers so the kernel's bf16
        # weight streaming is lossless w.r.t. the f32 reference in the checks.
        return a.astype(jnp.bfloat16).astype(jnp.float32)

    # Module-faithful init (BNNLayer.__init__: constant parameters).
    w_mean = jnp.full((n_input, n_output), prior_mean, jnp.float32)
    w_rho = jnp.full((n_input, n_output), prior_rho, jnp.float32)
    b_mean = jnp.full((1, n_output), prior_mean, jnp.float32)
    b_rho = jnp.full((1, n_output), prior_rho, jnp.float32)

    key = jax.random.PRNGKey(0)
    kx, kn, kw, ks = jax.random.split(key, 4)
    x = jax.random.normal(kx, (batch, n_input), jnp.float32)
    # TODO(synk): the PyTorch module samples noise from a pre-drawn numpy
    # gaussian block inside forward(); here standard-normal noise is an
    # explicit kernel input so the forward stays deterministic/functional.
    noise = jax.random.normal(kn, (batch, n_output), jnp.float32)

    # Small tiles so the (grid_n, grid_k) pipeline is exercised at toy shapes.
    fwd = functools.partial(bnn_layer_forward, mode="forward",
                            activation=activation, prior_rho=prior_rho,
                            tn_max=128, tk_max=128)

    # 1) module-faithful init (KL ~ 0 since W_rho == prior_rho), grid (3, 2)
    out, kl = fwd(x, w_mean, w_rho, b_mean, b_rho, noise)
    ref_out, ref_kl = _reference(x, w_mean, w_rho, b_mean, b_rho, noise,
                                 prior_rho)
    assert jnp.allclose(out, ref_out, atol=1e-4, rtol=1e-4)
    assert jnp.allclose(kl, ref_kl, atol=5e-2, rtol=2e-3)

    # 2) perturbed parameters -> non-trivial KL
    w_mean2 = bf16_exact(0.05 * jax.random.normal(kw, (n_input, n_output),
                                                  jnp.float32))
    w_rho2 = w_rho + 1.0
    out2, kl2 = fwd(x, w_mean2, w_rho2, b_mean, b_rho, noise)
    ref_out2, ref_kl2 = _reference(x, w_mean2, w_rho2, b_mean, b_rho, noise,
                                   prior_rho)
    assert jnp.allclose(out2, ref_out2, atol=2e-3, rtol=2e-3)
    assert jnp.allclose(kl2, ref_kl2, atol=1e-1, rtol=2e-3)

    # 3) n_output not a multiple of 128: lane padding + in-kernel masking
    n_out3 = 200
    w_mean3 = bf16_exact(0.05 * jax.random.normal(kw, (n_input, n_out3),
                                                  jnp.float32))
    w_rho3 = jnp.full((n_input, n_out3), -2.0, jnp.float32)
    b_mean3 = jnp.zeros((1, n_out3), jnp.float32)
    b_rho3 = jnp.full((1, n_out3), prior_rho, jnp.float32)
    noise3 = jax.random.normal(kn, (batch, n_out3), jnp.float32)
    out3, kl3 = fwd(x, w_mean3, w_rho3, b_mean3, b_rho3, noise3)
    ref_out3, ref_kl3 = _reference(x, w_mean3, w_rho3, b_mean3, b_rho3,
                                   noise3, prior_rho)
    assert jnp.allclose(out3, ref_out3, atol=2e-3, rtol=2e-3)
    assert jnp.allclose(kl3, ref_kl3, atol=1e-1, rtol=2e-3)

    # 4) multi-sample amortization: one weight pass, S=3 sampled outputs/KLs
    S = 3
    noiseS = jax.random.normal(ks, (S, batch, n_output), jnp.float32)
    outS, klS = fwd(x, w_mean2, w_rho2, b_mean, b_rho, noiseS)
    assert outS.shape == (S, batch, n_output) and klS.shape == (S,)
    for s in range(S):
        r_o, r_k = _reference(x, w_mean2, w_rho2, b_mean, b_rho, noiseS[s],
                              prior_rho)
        assert jnp.allclose(outS[s], r_o, atol=2e-3, rtol=2e-3)
        assert jnp.allclose(klS[s], r_k, atol=1e-1, rtol=2e-3)

    # 5) MAP mode (slim path: no W_rho / b_rho / noise DMA, no scratch)
    out_map = bnn_layer_forward(x, w_mean2, w_rho2, b_mean, b_rho,
                                mode="MAP", activation=activation,
                                prior_rho=prior_rho, tn_max=128, tk_max=128)
    ref_map = jnp.maximum(x @ w_mean2 + b_mean, 0.0)
    assert jnp.allclose(out_map, ref_map, atol=1e-4, rtol=1e-4)

    # 6) MC mode (sampled output, no KL)
    out_mc = bnn_layer_forward(x, w_mean2, w_rho2, b_mean, b_rho, noise,
                               mode="MC", activation=activation,
                               prior_rho=prior_rho, tn_max=128, tk_max=128)
    assert jnp.allclose(out_mc, out2, atol=1e-4, rtol=1e-4)

    # 7) cached softplus(W_rho)^2 path (variance computed once, reused); the
    #    looser tolerance accounts for bf16 rounding of the cached variances.
    w_sig2 = jax.nn.softplus(w_rho2) ** 2
    b_sig2 = jax.nn.softplus(b_rho) ** 2
    out7, kl7 = fwd(x, w_mean2, w_sig2, b_mean, b_sig2, noise,
                    rho_is_sigma2=True)
    assert jnp.allclose(out7, out2, atol=5e-2, rtol=1e-2)
    assert jnp.allclose(kl7, kl2, atol=2.0, rtol=5e-3)

    jax.block_until_ready((out, kl, out2, kl2, out3, kl3, outS, klS,
                           out_map, out_mc, out7, kl7))
    print("KERNEL_OK")
</pallas_src>

<mosaic_0001>
module attributes {stable_mosaic.version = 11 : i64} {
  func.func @_bnn_sample_kernel(%arg0: i32, %arg1: i32, %arg2: memref<8x128xf32, #tpu.memory_space<vmem>>, %arg3: memref<128x128xbf16, #tpu.memory_space<vmem>>, %arg4: memref<128x128xbf16, #tpu.memory_space<vmem>>, %arg5: memref<1x128xf32, #tpu.memory_space<vmem>>, %arg6: memref<1x128xf32, #tpu.memory_space<vmem>>, %arg7: memref<1x8x128xf32, #tpu.memory_space<vmem>>, %arg8: memref<1x8x128xf32, #tpu.memory_space<vmem>>, %arg9: memref<1x1x128xf32, #tpu.memory_space<vmem>>, %arg10: memref<8x128xf32, #tpu.memory_space<vmem>>, %arg11: memref<8x128xf32, #tpu.memory_space<vmem>>, %arg12: memref<8x1xf32, #tpu.memory_space<vmem>>) attributes {dimension_semantics = [#tpu.dimension_semantics<parallel>, #tpu.dimension_semantics<arbitrary>], iteration_bounds = array<i64: 3, 2>, scalar_prefetch = 0 : i64, scratch_operands = 3 : i64, tpu.core_type = #tpu.core_type<tc>, window_params = [{transform_indices = @transform_0, window_bounds = array<i64: 8, 128>}, {transform_indices = @transform_1, window_bounds = array<i64: 128, 128>}, {transform_indices = @transform_2, window_bounds = array<i64: 128, 128>}, {transform_indices = @transform_3, window_bounds = array<i64: 1, 128>}, {transform_indices = @transform_4, window_bounds = array<i64: 1, 128>}, {transform_indices = @transform_5, window_bounds = array<i64: 1, 8, 128>}, {transform_indices = @transform_6, window_bounds = array<i64: 1, 8, 128>}, {transform_indices = @transform_7, window_bounds = array<i64: 1, 1, 128>}]} {
    %c0_i32 = arith.constant 0 : i32
    %0 = arith.cmpi eq, %arg1, %c0_i32 : i32
    %1 = arith.extui %0 : i1 to i32
    %c0_i32_0 = arith.constant 0 : i32
    %2 = arith.cmpi ne, %1, %c0_i32_0 : i32
    scf.if %2 {
      %cst_24 = arith.constant 0.000000e+00 : f32
      %36 = vector.broadcast %cst_24 : f32 to vector<8x128xf32>
      %c0_25 = arith.constant 0 : index
      %c0_26 = arith.constant 0 : index
      %37 = vector.load %arg10[%c0_25, %c0_26] : memref<8x128xf32, #tpu.memory_space<vmem>>, vector<8x128xf32>
      tpu.vector_store %arg10[%c0_25, %c0_26], %36 {strides = array<i32>} : memref<8x128xf32, #tpu.memory_space<vmem>>, vector<8x128xf32>,
      %cst_27 = arith.constant 0.000000e+00 : f32
      %38 = vector.broadcast %cst_27 : f32 to vector<8x128xf32>
      %c0_28 = arith.constant 0 : index
      %c0_29 = arith.constant 0 : index
      %39 = vector.load %arg11[%c0_28, %c0_29] : memref<8x128xf32, #tpu.memory_space<vmem>>, vector<8x128xf32>
      tpu.vector_store %arg11[%c0_28, %c0_29], %38 {strides = array<i32>} : memref<8x128xf32, #tpu.memory_space<vmem>>, vector<8x128xf32>,
      %cst_30 = arith.constant 0.000000e+00 : f32
      %40 = vector.broadcast %cst_30 : f32 to vector<8x1xf32>
      %c0_31 = arith.constant 0 : index
      %c0_32 = arith.constant 0 : index
      %41 = vector.load %arg12[%c0_31, %c0_32] : memref<8x1xf32, #tpu.memory_space<vmem>>, vector<8x1xf32>
      tpu.vector_store %arg12[%c0_31, %c0_32], %40 {strides = array<i32>} : memref<8x1xf32, #tpu.memory_space<vmem>>, vector<8x1xf32>,
    } else {
    }
    %c0 = arith.constant 0 : index
    %c0_1 = arith.constant 0 : index
    %3 = vector.load %arg2[%c0, %c0_1] : memref<8x128xf32, #tpu.memory_space<vmem>>, vector<8x128xf32>
    %4 = arith.mulf %3, %3 : vector<8x128xf32>
    %c0_2 = arith.constant 0 : index
    %c0_3 = arith.constant 0 : index
    %5 = vector.load %arg3[%c0_2, %c0_3] : memref<128x128xbf16, #tpu.memory_space<vmem>>, vector<128x128xbf16>
    %6 = arith.extf %5 : vector<128x128xbf16> to vector<128x128xf32>
    %c0_4 = arith.constant 0 : index
    %c0_5 = arith.constant 0 : index
    %7 = vector.load %arg4[%c0_4, %c0_5] : memref<128x128xbf16, #tpu.memory_space<vmem>>, vector<128x128xbf16>
    %8 = arith.extf %7 : vector<128x128xbf16> to vector<128x128xf32>
    %cst = arith.constant 0.000000e+00 : f32
    %9 = vector.broadcast %cst : f32 to vector<128x128xf32>
    %10 = arith.maximumf %8, %9 : vector<128x128xf32>
    %11 = math.absf %8 : vector<128x128xf32>
    %cst_6 = arith.constant 0.000000e+00 : f32
    %12 = vector.broadcast %cst_6 : f32 to vector<128x128xf32>
    %13 = arith.subf %12, %11 : vector<128x128xf32>
    %14 = math.exp %13 : vector<128x128xf32>
    %cst_7 = arith.constant 1.000000e+00 : f32
    %15 = vector.broadcast %cst_7 : f32 to vector<128x128xf32>
    %16 = arith.addf %15, %14 : vector<128x128xf32>
    %17 = math.log %16 : vector<128x128xf32>
    %18 = arith.addf %10, %17 : vector<128x128xf32>
    %19 = arith.mulf %18, %18 : vector<128x128xf32>
    %c0_8 = arith.constant 0 : index
    %c0_9 = arith.constant 0 : index
    %20 = vector.load %arg10[%c0_8, %c0_9] : memref<8x128xf32, #tpu.memory_space<vmem>>, vector<8x128xf32>
    %cst_10 = arith.constant dense<0.000000e+00> : vector<8x128xf32>
    %21 = tpu.matmul %3, %6, %cst_10 {dimension_numbers = #tpu.dot_dimension_numbers<[1], [0], [0], [1], [0, 0, 1, 1], [], []>} : vector<8x128xf32>, vector<128x128xf32>, vector<8x128xf32> -> vector<8x128xf32>
    %22 = arith.addf %20, %21 : vector<8x128xf32>
    %c0_11 = arith.constant 0 : index
    %c0_12 = arith.constant 0 : index
    %23 = vector.load %arg10[%c0_11, %c0_12] : memref<8x128xf32, #tpu.memory_space<vmem>>, vector<8x128xf32>
    tpu.vector_store %arg10[%c0_11, %c0_12], %22 {strides = array<i32>} : memref<8x128xf32, #tpu.memory_space<vmem>>, vector<8x128xf32>,
    %c0_13 = arith.constant 0 : index
    %c0_14 = arith.constant 0 : index
    %24 = vector.load %arg11[%c0_13, %c0_14] : memref<8x128xf32, #tpu.memory_space<vmem>>, vector<8x128xf32>
    %cst_15 = arith.constant dense<0.000000e+00> : vector<8x128xf32>
    %25 = tpu.matmul %4, %19, %cst_15 {dimension_numbers = #tpu.dot_dimension_numbers<[1], [0], [0], [1], [0, 0, 1, 1], [], []>} : vector<8x128xf32>, vector<128x128xf32>, vector<8x128xf32> -> vector<8x128xf32>
    %26 = arith.addf %24, %25 : vector<8x128xf32>
    %c0_16 = arith.constant 0 : index
    %c0_17 = arith.constant 0 : index
    %27 = vector.load %arg11[%c0_16, %c0_17] : memref<8x128xf32, #tpu.memory_space<vmem>>, vector<8x128xf32>
    tpu.vector_store %arg11[%c0_16, %c0_17], %26 {strides = array<i32>} : memref<8x128xf32, #tpu.memory_space<vmem>>, vector<8x128xf32>,
    %c0_18 = arith.constant 0 : index
    %c0_19 = arith.constant 0 : index
    %28 = vector.load %arg12[%c0_18, %c0_19] : memref<8x1xf32, #tpu.memory_space<vmem>>, vector<8x1xf32>
    %cst_20 = arith.constant dense<0.000000e+00> : vector<8xf32>
    %29 = vector.multi_reduction <add>, %4, %cst_20 [1] : vector<8x128xf32> to vector<8xf32>
    %30 = vector.shape_cast %29 : vector<8xf32> to vector<8x1xf32>
    %31 = arith.addf %28, %30 : vector<8x1xf32>
    %c0_21 = arith.constant 0 : index
    %c0_22 = arith.constant 0 : index
    %32 = vector.load %arg12[%c0_21, %c0_22] : memref<8x1xf32, #tpu.memory_space<vmem>>, vector<8x1xf32>
    tpu.vector_store %arg12[%c0_21, %c0_22], %31 {strides = array<i32>} : memref<8x1xf32, #tpu.memory_space<vmem>>, vector<8x1xf32>,
    %c1_i32 = arith.constant 1 : i32
    %33 = arith.cmpi eq, %arg1, %c1_i32 : i32
    %34 = arith.extui %33 : i1 to i32
    %c0_i32_23 = arith.constant 0 : i32
    %35 = arith.cmpi ne, %34, %c0_i32_23 : i32
    scf.if %35 {
      %c0_24 = arith.constant 0 : index
      %c0_25 = arith.constant 0 : index
      %36 = vector.load %arg6[%c0_24, %c0_25] : memref<1x128xf32, #tpu.memory_space<vmem>>, vector<1x128xf32>
      %cst_26 = arith.constant 0.000000e+00 : f32
      %37 = vector.broadcast %cst_26 : f32 to vector<1x128xf32>
      %38 = arith.maximumf %36, %37 : vector<1x128xf32>
      %39 = math.absf %36 : vector<1x128xf32>
      %cst_27 = arith.constant 0.000000e+00 : f32
      %40 = vector.broadcast %cst_27 : f32 to vector<1x128xf32>
      %41 = arith.subf %40, %39 : vector<1x128xf32>
      %42 = math.exp %41 : vector<1x128xf32>
      %cst_28 = arith.constant 1.000000e+00 : f32
      %43 = vector.broadcast %cst_28 : f32 to vector<1x128xf32>
      %44 = arith.addf %43, %42 : vector<1x128xf32>
      %45 = math.log %44 : vector<1x128xf32>
      %46 = arith.addf %38, %45 : vector<1x128xf32>
      %47 = arith.mulf %46, %46 : vector<1x128xf32>
      %c0_29 = arith.constant 0 : index
      %c0_30 = arith.constant 0 : index
      %48 = vector.load %arg10[%c0_29, %c0_30] : memref<8x128xf32, #tpu.memory_space<vmem>>, vector<8x128xf32>
      %c0_31 = arith.constant 0 : index
      %c0_32 = arith.constant 0 : index
      %49 = vector.load %arg5[%c0_31, %c0_32] : memref<1x128xf32, #tpu.memory_space<vmem>>, vector<1x128xf32>
      %50 = vector.broadcast %49 : vector<1x128xf32> to vector<8x128xf32>
      %51 = arith.addf %48, %50 : vector<8x128xf32>
      %c0_33 = arith.constant 0 : index
      %c0_34 = arith.constant 0 : index
      %52 = vector.load %arg11[%c0_33, %c0_34] : memref<8x128xf32, #tpu.memory_space<vmem>>, vector<8x128xf32>
      %53 = vector.broadcast %47 : vector<1x128xf32> to vector<8x128xf32>
      %54 = arith.addf %52, %53 : vector<8x128xf32>
      %55 = math.sqrt %54 : vector<8x128xf32>
      %c0_35 = arith.constant 0 : index
      %c0_36 = arith.constant 0 : index
      %56 = vector.load %arg12[%c0_35, %c0_36] : memref<8x1xf32, #tpu.memory_space<vmem>>, vector<8x1xf32>
      %cst_37 = arith.constant 0.00236073066 : f32
      %57 = vector.broadcast %cst_37 : f32 to vector<8x1xf32>
      %58 = arith.mulf %57, %56 : vector<8x1xf32>
      %cst_38 = arith.constant 0.00236073066 : f32
      %59 = vector.broadcast %cst_38 : f32 to vector<8x1xf32>
      %60 = arith.addf %58, %59 : vector<8x1xf32>
      %61 = tpu.reciprocal %60 : vector<8x1xf32> -> vector<8x1xf32>
      %62 = math.log %60 : vector<8x1xf32>
      %63 = math.log %54 : vector<8x128xf32>
      %64 = vector.broadcast %62 : vector<8x1xf32> to vector<8x128xf32>
      %65 = arith.subf %64, %63 : vector<8x128xf32>
      %c0_39 = arith.constant 0 : index
      %c0_40 = arith.constant 0 : index
      %c0_41 = arith.constant 0 : index
      %66 = vector.load %arg7[%c0_39, %c0_40, %c0_41] : memref<1x8x128xf32, #tpu.memory_space<vmem>>, vector<1x8x128xf32>
      %67 = vector.shape_cast %66 : vector<1x8x128xf32> to vector<8x128xf32>
      %68 = arith.mulf %55, %67 : vector<8x128xf32>
      %69 = arith.addf %51, %68 : vector<8x128xf32>
      %cst_42 = arith.constant 0.000000e+00 : f32
      %70 = vector.broadcast %cst_42 : f32 to vector<8x128xf32>
      %71 = arith.maximumf %69, %70 : vector<8x128xf32>
      %c0_43 = arith.constant 0 : index
      %c0_44 = arith.constant 0 : index
      %c0_45 = arith.constant 0 : index
      %72 = vector.load %arg8[%c0_43, %c0_44, %c0_45] : memref<1x8x128xf32, #tpu.memory_space<vmem>>, vector<1x8x128xf32>
      %73 = vector.shape_cast %72 : vector<1x8x128xf32> to vector<8x128xf32>
      %74 = vector.shape_cast %71 : vector<8x128xf32> to vector<1x8x128xf32>
      tpu.vector_store %arg8[%c0_43, %c0_44, %c0_45], %74 {strides = array<i32>} : memref<1x8x128xf32, #tpu.memory_space<vmem>>, vector<1x8x128xf32>,
      %75 = arith.mulf %67, %67 : vector<8x128xf32>
      %76 = arith.subf %65, %75 : vector<8x128xf32>
      %77 = arith.mulf %54, %75 : vector<8x128xf32>
      %78 = vector.broadcast %61 : vector<8x1xf32> to vector<8x128xf32>
      %79 = arith.mulf %77, %78 : vector<8x128xf32>
      %80 = arith.addf %76, %79 : vector<8x128xf32>
      %cst_46 = arith.constant 5.000000e-01 : f32
      %81 = vector.broadcast %cst_46 : f32 to vector<8x128xf32>
      %82 = arith.mulf %81, %80 : vector<8x128xf32>
      %83 = vector.shape_cast %82 : vector<8x128xf32> to vector<1x8x128xf32>
      %cst_47 = arith.constant dense<0.000000e+00> : vector<1xf32>
      %84 = vector.multi_reduction <add>, %83, %cst_47 [1, 2] : vector<1x8x128xf32> to vector<1xf32>
      %85 = vector.shape_cast %84 : vector<1xf32> to vector<1x1x1xf32>
      %86 = vector.extract %85[0, 0, 0] : f32 from vector<1x1x1xf32>
      %87 = vector.broadcast %86 : f32 to vector<1x128xf32>
      %c0_48 = arith.constant 0 : index
      %c0_49 = arith.constant 0 : index
      %c0_50 = arith.constant 0 : index
      %88 = vector.load %arg9[%c0_48, %c0_49, %c0_50] : memref<1x1x128xf32, #tpu.memory_space<vmem>>, vector<1x1x128xf32>
      %89 = vector.shape_cast %88 : vector<1x1x128xf32> to vector<1x128xf32>
      %90 = vector.shape_cast %87 : vector<1x128xf32> to vector<1x1x128xf32>
      tpu.vector_store %arg9[%c0_48, %c0_49, %c0_50], %90 {strides = array<i32>} : memref<1x1x128xf32, #tpu.memory_space<vmem>>, vector<1x1x128xf32>,
    } else {
    }
    return
  }
  func.func @transform_0(%arg0: i32, %arg1: i32) -> (i32, i32) {
    %c0_i32 = arith.constant 0 : i32
    %c0_i32_0 = arith.constant 0 : i32
    return %c0_i32, %arg1 : i32, i32
  }
  func.func @transform_1(%arg0: i32, %arg1: i32) -> (i32, i32) {
    %c0_i32 = arith.constant 0 : i32
    return %arg1, %arg0 : i32, i32
  }
  func.func @transform_2(%arg0: i32, %arg1: i32) -> (i32, i32) {
    %c0_i32 = arith.constant 0 : i32
    return %arg1, %arg0 : i32, i32
  }
  func.func @transform_3(%arg0: i32, %arg1: i32) -> (i32, i32) {
    %c0_i32 = arith.constant 0 : i32
    %c0_i32_0 = arith.constant 0 : i32
    return %c0_i32, %arg0 : i32, i32
  }
  func.func @transform_4(%arg0: i32, %arg1: i32) -> (i32, i32) {
    %c0_i32 = arith.constant 0 : i32
    %c0_i32_0 = arith.constant 0 : i32
    return %c0_i32, %arg0 : i32, i32
  }
  func.func @transform_5(%arg0: i32, %arg1: i32) -> (i32, i32, i32) {
    %c0_i32 = arith.constant 0 : i32
    %c0_i32_0 = arith.constant 0 : i32
    %c0_i32_1 = arith.constant 0 : i32
    return %c0_i32, %c0_i32_0, %arg0 : i32, i32, i32
  }
  func.func @transform_6(%arg0: i32, %arg1: i32) -> (i32, i32, i32) {
    %c0_i32 = arith.constant 0 : i32
    %c0_i32_0 = arith.constant 0 : i32
    %c0_i32_1 = arith.constant 0 : i32
    return %c0_i32, %c0_i32_0, %arg0 : i32, i32, i32
  }
  func.func @transform_7(%arg0: i32, %arg1: i32) -> (i32, i32, i32) {
    %c0_i32 = arith.constant 0 : i32
    %c0_i32_0 = arith.constant 0 : i32
    %c0_i32_1 = arith.constant 0 : i32
    return %arg0, %c0_i32, %c0_i32_0 : i32, i32, i32
  }
}

</mosaic_0001>

<llo_original>
// kernel: tpu_custom_call.1
$region0: #{tpu_custom_call.1}
  #allocation0 [shape = 'u32[]', space=smem, size = 0x4, offset = 0x4, fixed_abs, tag = 'smem constant byte address 0x4 - core index']
  #allocation1 [shape = 'u32[144,128]{1,0:T(1,128)}', space=vmem, size = 0x12000, scoped, tag = 'internal scratch']
  #allocation2 [shape = 'f32[8,128]{1,0:T(8,128)}', space=vmem, size = 0x1000, scoped, tag = 'scratch operand']
  #allocation3 [shape = 'f32[8,128]{1,0:T(8,128)}', space=vmem, size = 0x1000, scoped, tag = 'scratch operand']
  #allocation4 [shape = 'f32[8,1]{1,0:T(8,128)}', space=vmem, size = 0x1000, scoped, tag = 'scratch operand']
  %s0 = inlined_call_operand.hbm [shape: f32[8,256], index: 0, kind: input, shape index: {}]
  %s1 = inlined_call_operand.hbm [shape: bf16[256,384], index: 1, kind: input, shape index: {}]
  %s2 = inlined_call_operand.hbm [shape: bf16[256,384], index: 2, kind: input, shape index: {}]
  %s3 = inlined_call_operand.vmem [shape: f32[1,384], index: 3, kind: input, shape index: {}]
  %s4 = inlined_call_operand.vmem [shape: f32[1,384], index: 4, kind: input, shape index: {}]
  %s5 = inlined_call_operand.hbm [shape: f32[1,8,384], index: 5, kind: input, shape index: {}]
  %s6 = inlined_call_operand.hbm [shape: f32[1,8,384], index: 6, kind: output, shape index: {0}]
  %s7 = inlined_call_operand.hbm [shape: f32[3,1,128], index: 7, kind: output, shape index: {1}]
  %8 = xla_tuple %s6, %s7
  %s9 = sld [smem:[#allocation0]]
  $region89: #{tpu_custom_call.1} parent=0
    _
  %s11 = ssub.s32 1, %s9
  %s12 = scalar_select 0, %s11, %s9
  $region1: #{tpu_custom_call.1} parent=0
    #allocation5 [shape = 'u8[8192]{0}', space=vmem, size = 0x2000, scoped, tag = 'input window, operand 0']
    #allocation6 [shape = 's32[2]{0}', space=sflag, size = 0x8, scoped, tag = 'scoped memory for tpu_custom_call.1']
    #allocation7 [shape = 's32[2]{0}', space=sflag, size = 0x8, scoped, tag = 'scoped memory for tpu_custom_call.1']
    #allocation8 [shape = 'u8[65536]{0}', space=vmem, size = 0x10000, scoped, tag = 'input window, operand 1']
    #allocation9 [shape = 's32[2]{0}', space=sflag, size = 0x8, scoped, tag = 'scoped memory for tpu_custom_call.1']
    #allocation10 [shape = 'u8[65536]{0}', space=vmem, size = 0x10000, scoped, tag = 'input window, operand 2']
    #allocation11 [shape = 'u8[8192]{0}', space=vmem, size = 0x2000, scoped, tag = 'input window, operand 5']
    #allocation12 [shape = 's32[2]{0}', space=sflag, size = 0x8, scoped, tag = 'scoped memory for tpu_custom_call.1']
    #allocation13 [shape = 'u8[8192]{0}', space=vmem, size = 0x2000, scoped, tag = 'output window, operand 0']
    #allocation14 [shape = 'u8[1024]{0}', space=vmem, size = 0x400, scoped, tag = 'output window, operand 1']
    #allocation15 [shape = 's32[2]{0}', space=sflag, size = 0x8, scoped, tag = 'scoped memory for tpu_custom_call.1']
    %13 = vsyncpa [#allocation6], 0
    %s14 = scalar_lea.sflag [#allocation6], 1
    %15 = vsyncpa %s14, 0
    %16 = vsyncpa [#allocation9], 0
    %s17 = scalar_lea.sflag [#allocation9], 1
    %18 = vsyncpa %s17, 0
    %19 = vsyncpa [#allocation12], 0
    %s20 = scalar_lea.sflag [#allocation12], 1
    %21 = vsyncpa %s20, 0
    %22 = vsyncpa [#allocation7], 0
    %s23 = scalar_lea.sflag [#allocation7], 1
    %24 = vsyncpa %s23, 0
    %25 = vsyncpa [#allocation15], 0
    %s26 = scalar_lea.sflag [#allocation15], 1
    %27 = vsyncpa %s26, 0
    loop: start=0, step=1, limit=8
    $region2: #{tpu_custom_call.1} parent=1 // loop_pre_header
      _
    $region3: #{tpu_custom_call.1} parent=1 // loop_header
      %s29 = sphi 0, %s33
      %p30 = scmp.ge.s32.totalorder %s29, 8
      %s36 = sphi 0, %s48
      %s37 = sphi 0, %s44
      %s38 = sphi 0, %s36
      %s39 = sphi 0, %s37
      %s40 = sphi 0, %s38
      %s41 = sphi 0, %s39
      %s51 = sphi 0, %s53
      %s54 = sphi 0, %s51
      %s55 = sphi 0, %s54
      %s71 = sphi 0, %s55
      %s79 = sphi 0, %s81
      %s82 = sphi 0, %s79
      %s83 = sphi 0, %s82
      %s99 = sphi 0, %s83
      %s107 = sphi 0, %s109
      %s110 = sphi 0, %s107
      %s111 = sphi 0, %s110
      %s127 = sphi 0, %s111
      %s133 = sphi 0, %s135
      %s136 = sphi 0, %s133
      %s137 = sphi 0, %s136
      %s153 = sphi 0, %s137
      %s159 = sphi 0, %s161
      %s162 = sphi 0, %s159
      %s163 = sphi 0, %s162
      %s179 = sphi 0, %s163
      %s185 = sphi 0, %s187
      %s188 = sphi 0, %s185
      %s189 = sphi 0, %s188
      %s205 = sphi 0, %s189
      %s211 = sphi 0, %s213
      %s214 = sphi 0, %s211
      %s215 = sphi 0, %s214
      %s231 = sphi 0, %s215
      %s237 = sphi 0, %s239
      %s240 = sphi 0, %s237
      %s241 = sphi 0, %s240
      %s257 = sphi 0, %s241
    $region4: #{tpu_custom_call.1} parent=1 // loop_header_branch
      %32 = sbr.rel (%p30) target = $region8
    $region5: #{tpu_custom_call.1} parent=1 // loop_body
      %s34 = ssub.s32 %s29, 1
      %s35 = ssub.s32 %s29, 2
      %s42 = sadd.s32 1, %s37
      %p43 = scmp.ge.s32.totalorder %s42, 2
      %s44 = scalar_select %p43, 0, %s42
      %s45 = sadd.s32 1, %s36
      %s46 = scalar_select %p43, %s45, %s36
      %p47 = scmp.ge.s32.totalorder %s46, 3
      %s48 = scalar_select %p47, 0, %s46
      %s49 = ssub.s32 %s37, %s44
      %p50 = scmp.eq.s32.totalorder %s49, 0
      %s52 = sadd.s32 %s51, 1
      %s53 = scalar_select %p50, %s51, %s52
      %p56 = pneg %p50
      %p57 = scmp.eq.s32.totalorder %s29, 5
      %p58 = por %p56, %p57
      %p59 = scmp.ne.s32.totalorder %s51, %s54
      %p60 = scmp.eq.s32.totalorder %s29, 0
      %p61 = por %p59, %p60
      %p62 = scmp.ne.s32.totalorder %s51, %s54
      %p63 = scmp.eq.s32.totalorder %s34, 5
      %p64 = por %p62, %p63
      %p65 = scmp.ne.s32.totalorder %s54, %s55
      %p66 = scmp.eq.s32.totalorder %s34, 0
      %p67 = por %p65, %p66
      %p68 = scmp.ne.s32.totalorder %s54, %s55
      %p69 = scmp.eq.s32.totalorder %s35, 5
      %p70 = por %p68, %p69
      %p72 = scmp.ne.s32.totalorder %s55, %s71
      %p73 = scmp.eq.s32.totalorder %s35, 0
      %p74 = por %p72, %p73
      %s75 = ssub.s32 %s37, %s44
      %s76 = ssub.s32 %s36, %s48
      %s77 = sor.u32 %s75, %s76
      %p78 = scmp.eq.s32.totalorder %s77, 0
      %s80 = sadd.s32 %s79, 1
      %s81 = scalar_select %p78, %s79, %s80
      %p84 = pneg %p78
      %p85 = scmp.eq.s32.totalorder %s29, 5
      %p86 = por %p84, %p85
      %p87 = scmp.ne.s32.totalorder %s79, %s82
      %p88 = scmp.eq.s32.totalorder %s29, 0
      %p89 = por %p87, %p88
      %p90 = scmp.ne.s32.totalorder %s79, %s82
      %p91 = scmp.eq.s32.totalorder %s34, 5
      %p92 = por %p90, %p91
      %p93 = scmp.ne.s32.totalorder %s82, %s83
      %p94 = scmp.eq.s32.totalorder %s34, 0
      %p95 = por %p93, %p94
      %p96 = scmp.ne.s32.totalorder %s82, %s83
      %p97 = scmp.eq.s32.totalorder %s35, 5
      %p98 = por %p96, %p97
      %p100 = scmp.ne.s32.totalorder %s83, %s99
      %p101 = scmp.eq.s32.totalorder %s35, 0
      %p102 = por %p100, %p101
      %s103 = ssub.s32 %s37, %s44
      %s104 = ssub.s32 %s36, %s48
      %s105 = sor.u32 %s103, %s104
      %p106 = scmp.eq.s32.totalorder %s105, 0
      %s108 = sadd.s32 %s107, 1
      %s109 = scalar_select %p106, %s107, %s108
      %p112 = pneg %p106
      %p113 = scmp.eq.s32.totalorder %s29, 5
      %p114 = por %p112, %p113
      %p115 = scmp.ne.s32.totalorder %s107, %s110
      %p116 = scmp.eq.s32.totalorder %s29, 0
      %p117 = por %p115, %p116
      %p118 = scmp.ne.s32.totalorder %s107, %s110
      %p119 = scmp.eq.s32.totalorder %s34, 5
      %p120 = por %p118, %p119
      %p121 = scmp.ne.s32.totalorder %s110, %s111
      %p122 = scmp.eq.s32.totalorder %s34, 0
      %p123 = por %p121, %p122
      %p124 = scmp.ne.s32.totalorder %s110, %s111
      %p125 = scmp.eq.s32.totalorder %s35, 5
      %p126 = por %p124, %p125
      %p128 = scmp.ne.s32.totalorder %s111, %s127
      %p129 = scmp.eq.s32.totalorder %s35, 0
      %p130 = por %p128, %p129
      %s131 = ssub.s32 %s36, %s48
      %p132 = scmp.eq.s32.totalorder %s131, 0
      %s134 = sadd.s32 %s133, 1
      %s135 = scalar_select %p132, %s133, %s134
      %p138 = pneg %p132
      %p139 = scmp.eq.s32.totalorder %s29, 5
      %p140 = por %p138, %p139
      %p141 = scmp.ne.s32.totalorder %s133, %s136
      %p142 = scmp.eq.s32.totalorder %s29, 0
      %p143 = por %p141, %p142
      %p144 = scmp.ne.s32.totalorder %s133, %s136
      %p145 = scmp.eq.s32.totalorder %s34, 5
      %p146 = por %p144, %p145
      %p147 = scmp.ne.s32.totalorder %s136, %s137
      %p148 = scmp.eq.s32.totalorder %s34, 0
      %p149 = por %p147, %p148
      %p150 = scmp.ne.s32.totalorder %s136, %s137
      %p151 = scmp.eq.s32.totalorder %s35, 5
      %p152 = por %p150, %p151
      %p154 = scmp.ne.s32.totalorder %s137, %s153
      %p155 = scmp.eq.s32.totalorder %s35, 0
      %p156 = por %p154, %p155
      %s157 = ssub.s32 %s36, %s48
      %p158 = scmp.eq.s32.totalorder %s157, 0
      %s160 = sadd.s32 %s159, 1
      %s161 = scalar_select %p158, %s159, %s160
      %p164 = pneg %p158
      %p165 = scmp.eq.s32.totalorder %s29, 5
      %p166 = por %p164, %p165
      %p167 = scmp.ne.s32.totalorder %s159, %s162
      %p168 = scmp.eq.s32.totalorder %s29, 0
      %p169 = por %p167, %p168
      %p170 = scmp.ne.s32.totalorder %s159, %s162
      %p171 = scmp.eq.s32.totalorder %s34, 5
      %p172 = por %p170, %p171
      %p173 = scmp.ne.s32.totalorder %s162, %s163
      %p174 = scmp.eq.s32.totalorder %s34, 0
      %p175 = por %p173, %p174
      %p176 = scmp.ne.s32.totalorder %s162, %s163
      %p177 = scmp.eq.s32.totalorder %s35, 5
      %p178 = por %p176, %p177
      %p180 = scmp.ne.s32.totalorder %s163, %s179
      %p181 = scmp.eq.s32.totalorder %s35, 0
      %p182 = por %p180, %p181
      %s183 = ssub.s32 %s36, %s48
      %p184 = scmp.eq.s32.totalorder %s183, 0
      %s186 = sadd.s32 %s185, 1
      %s187 = scalar_select %p184, %s185, %s186
      %p190 = pneg %p184
      %p191 = scmp.eq.s32.totalorder %s29, 5
      %p192 = por %p190, %p191
      %p193 = scmp.ne.s32.totalorder %s185, %s188
      %p194 = scmp.eq.s32.totalorder %s29, 0
      %p195 = por %p193, %p194
      %p196 = scmp.ne.s32.totalorder %s185, %s188
      %p197 = scmp.eq.s32.totalorder %s34, 5
      %p198 = por %p196, %p197
      %p199 = scmp.ne.s32.totalorder %s188, %s189
      %p200 = scmp.eq.s32.totalorder %s34, 0
      %p201 = por %p199, %p200
      %p202 = scmp.ne.s32.totalorder %s188, %s189
      %p203 = scmp.eq.s32.totalorder %s35, 5
      %p204 = por %p202, %p203
      %p206 = scmp.ne.s32.totalorder %s189, %s205
      %p207 = scmp.eq.s32.totalorder %s35, 0
      %p208 = por %p206, %p207
      %s209 = ssub.s32 %s36, %s48
      %p210 = scmp.eq.s32.totalorder %s209, 0
      %s212 = sadd.s32 %s211, 1
      %s213 = scalar_select %p210, %s211, %s212
      %p216 = pneg %p210
      %p217 = scmp.eq.s32.totalorder %s29, 5
      %p218 = por %p216, %p217
      %p219 = scmp.ne.s32.totalorder %s211, %s214
      %p220 = scmp.eq.s32.totalorder %s29, 0
      %p221 = por %p219, %p220
      %p222 = scmp.ne.s32.totalorder %s211, %s214
      %p223 = scmp.eq.s32.totalorder %s34, 5
      %p224 = por %p222, %p223
      %p225 = scmp.ne.s32.totalorder %s214, %s215
      %p226 = scmp.eq.s32.totalorder %s34, 0
      %p227 = por %p225, %p226
      %p228 = scmp.ne.s32.totalorder %s214, %s215
      %p229 = scmp.eq.s32.totalorder %s35, 5
      %p230 = por %p228, %p229
      %p232 = scmp.ne.s32.totalorder %s215, %s231
      %p233 = scmp.eq.s32.totalorder %s35, 0
      %p234 = por %p232, %p233
      %s235 = ssub.s32 %s36, %s48
      %p236 = scmp.eq.s32.totalorder %s235, 0
      %s238 = sadd.s32 %s237, 1
      %s239 = scalar_select %p236, %s237, %s238
      %p242 = pneg %p236
      %p243 = scmp.eq.s32.totalorder %s29, 5
      %p244 = por %p242, %p243
      %p245 = scmp.ne.s32.totalorder %s237, %s240
      %p246 = scmp.eq.s32.totalorder %s29, 0
      %p247 = por %p245, %p246
      %p248 = scmp.ne.s32.totalorder %s237, %s240
      %p249 = scmp.eq.s32.totalorder %s34, 5
      %p250 = por %p248, %p249
      %p251 = scmp.ne.s32.totalorder %s240, %s241
      %p252 = scmp.eq.s32.totalorder %s34, 0
      %p253 = por %p251, %p252
      %p254 = scmp.ne.s32.totalorder %s240, %s241
      %p255 = scmp.eq.s32.totalorder %s35, 5
      %p256 = por %p254, %p255
      %p258 = scmp.ne.s32.totalorder %s241, %s257
      %p259 = scmp.eq.s32.totalorder %s35, 0
      %p260 = por %p258, %p259
      %p261 = scmp.le.s32.totalorder 1, %s29
      %p262 = scmp.lt.s32.totalorder %s29, 7
      %p263 = pnand %p261, %p262
      %p264 = pneg %p263
      // Predicated region
      $region9: #{tpu_custom_call.1} parent=5 // pred_check
        _
      $region10: #{tpu_custom_call.1} parent=5 // pred_check_branch
        %266 = sbr.rel (%p263) target = $region12
      $region11: #{tpu_custom_call.1} parent=5 // pred_region
        %s267 = ssub.s32 %s29, 1
      $region12: #{tpu_custom_call.1} parent=5 // pred_fallthru
        _
      %p268 = scmp.lt.s32.totalorder %s29, 6
      // Predicated region
      $region13: #{tpu_custom_call.1} parent=5 // pred_check
        %p269 = pneg %p268
      $region14: #{tpu_custom_call.1} parent=5 // pred_check_branch
        %271 = sbr.rel (%p269) target = $region16
      $region15: #{tpu_custom_call.1} parent=5 // pred_region
        // Predicated region
        $region17: #{tpu_custom_call.1} parent=15 // pred_check
          %p272 = pneg %p61
        $region18: #{tpu_custom_call.1} parent=15 // pred_check_branch
          %274 = sbr.rel (%p272) target = $region20
        $region19: #{tpu_custom_call.1} parent=15 // pred_region
          %s275 = sand.u32 %s51, 1
          %s276 = scalar_lea.sflag [#allocation6], %s275
          %s277 = sand.u32 %s51, 1
          %s278 = smul.addr %s277, 8
          %s279 = scalar_lea.vmem [#allocation5], %s278
          %s281 = ssub.s32 128, 128
          %282 = vsyncadd %s276, %s281
          %s283 = smul.addr %s37, 128
          %s284 = scalar_lea.hbm %s0, %s283
          %s286 = sshll.u32 %s279, 4
          %s287 = int_to_ptr.vmem [resolvable:$true] %s286
          %289 = dma.hbm_to_vmem [thread:$0]  %s284, 128, %s287, %s276
        $region20: #{tpu_custom_call.1} parent=15 // pred_fallthru
          _
        // Predicated region
        $region21: #{tpu_custom_call.1} parent=15 // pred_check
          %p290 = pneg %p89
        $region22: #{tpu_custom_call.1} parent=15 // pred_check_branch
          %292 = sbr.rel (%p290) target = $region24
        $region23: #{tpu_custom_call.1} parent=15 // pred_region
          %s293 = sand.u32 %s29, 1
          %s294 = scalar_lea.sflag [#allocation9], %s293
          %s295 = sand.u32 %s79, 1
          %s296 = smul.addr %s295, 64
          %s297 = scalar_lea.vmem [#allocation8], %s296
          %s298 = smul.u32 16, %s37
          %s300 = ssub.s32 1024, 1024
          %301 = vsyncadd %s294, %s300
          %s302 = smul.addr %s298, 3
          %s303 = sadd.s32 %s36, %s302
          %s304 = smul.addr %s303, 64
          %s305 = scalar_lea.hbm %s1, %s304
          %s306 = sshll.u32 %s297, 4
          %s307 = int_to_ptr.vmem [resolvable:$true] %s306
          %312 = dma.hbm_to_vmem [thread:$0]  %s305, 1024, %s307, %s294, 192, 64, 4
        $region24: #{tpu_custom_call.1} parent=15 // pred_fallthru
          _
        // Predicated region
        $region25: #{tpu_custom_call.1} parent=15 // pred_check
          %p313 = pneg %p117
        $region26: #{tpu_custom_call.1} parent=15 // pred_check_branch
          %315 = sbr.rel (%p313) target = $region28
        $region27: #{tpu_custom_call.1} parent=15 // pred_region
          %s316 = sand.u32 %s29, 1
          %s317 = scalar_lea.sflag [#allocation9], %s316
          %s318 = sand.u32 %s107, 1
          %s319 = smul.addr %s318, 64
          %s320 = scalar_lea.vmem [#allocation10], %s319
          %s321 = smul.u32 16, %s37
          %s323 = ssub.s32 1024, 1024
          %324 = vsyncadd %s317, %s323
          %s325 = smul.addr %s321, 3
          %s326 = sadd.s32 %s36, %s325
          %s327 = smul.addr %s326, 64
          %s328 = scalar_lea.hbm %s2, %s327
          %s329 = sshll.u32 %s320, 4
          %s330 = int_to_ptr.vmem [resolvable:$true] %s329
          %335 = dma.hbm_to_vmem [thread:$0]  %s328, 1024, %s330, %s317, 192, 64, 4
        $region28: #{tpu_custom_call.1} parent=15 // pred_fallthru
          _
        // Predicated region
        $region29: #{tpu_custom_call.1} parent=15 // pred_check
          %p336 = pneg %p143
        $region30: #{tpu_custom_call.1} parent=15 // pred_check_branch
          %338 = sbr.rel (%p336) target = $region32
        $region31: #{tpu_custom_call.1} parent=15 // pred_region
          %p339 = scmp.lt.s32.totalorder %s36, 2
          %s340 = scalar_select %p339, %s36, 2
          %s341 = scalar_lea.vmem %s3, %s340
        $region32: #{tpu_custom_call.1} parent=15 // pred_fallthru
          _
        // Predicated region
        $region33: #{tpu_custom_call.1} parent=15 // pred_check
          %p342 = pneg %p169
        $region34: #{tpu_custom_call.1} parent=15 // pred_check_branch
          %344 = sbr.rel (%p342) target = $region36
        $region35: #{tpu_custom_call.1} parent=15 // pred_region
          %p345 = scmp.lt.s32.totalorder %s36, 2
          %s346 = scalar_select %p345, %s36, 2
          %s347 = scalar_lea.vmem %s4, %s346
        $region36: #{tpu_custom_call.1} parent=15 // pred_fallthru
          _
        // Predicated region
        $region37: #{tpu_custom_call.1} parent=15 // pred_check
          %p348 = pneg %p195
        $region38: #{tpu_custom_call.1} parent=15 // pred_check_branch
          %350 = sbr.rel (%p348) target = $region40
        $region39: #{tpu_custom_call.1} parent=15 // pred_region
          %s351 = sand.u32 %s185, 1
          %s352 = scalar_lea.sflag [#allocation12], %s351
          %s353 = sand.u32 %s185, 1
          %s354 = smul.addr %s353, 8
          %s355 = scalar_lea.vmem [#allocation11], %s354
          %s357 = ssub.s32 128, 128
          %358 = vsyncadd %s352, %s357
          %s359 = smul.addr %s36, 128
          %s360 = scalar_lea.hbm %s5, %s359
          %s362 = sshll.u32 %s355, 4
          %s363 = int_to_ptr.vmem [resolvable:$true] %s362
          %365 = dma.hbm_to_vmem [thread:$0]  %s360, 128, %s363, %s352
        $region40: #{tpu_custom_call.1} parent=15 // pred_fallthru
          _
      $region16: #{tpu_custom_call.1} parent=5 // pred_fallthru
        _
      %p366 = scmp.le.s32.totalorder 1, %s29
      %p367 = scmp.lt.s32.totalorder %s29, 7
      %p368 = pnand %p366, %p367
      %p369 = pneg %p368
      // Predicated region
      $region41: #{tpu_custom_call.1} parent=5 // pred_check
        _
      $region42: #{tpu_custom_call.1} parent=5 // pred_check_branch
        %371 = sbr.rel (%p368) target = $region44
      $region43: #{tpu_custom_call.1} parent=5 // pred_region
        %s372 = ssub.s32 %s29, 1
        %s373 = sand.u32 %s54, 1
        %s374 = scalar_lea.sflag [#allocation6], %s373
        %s375 = sand.u32 %s54, 1
        %s376 = smul.addr %s375, 8
        %s377 = scalar_lea.vmem [#allocation5], %s376
        // Predicated region
        $region45: #{tpu_custom_call.1} parent=43 // pred_check
          %p378 = pneg %p67
        $region46: #{tpu_custom_call.1} parent=43 // pred_check_branch
          %380 = sbr.rel (%p378) target = $region48
        $region47: #{tpu_custom_call.1} parent=43 // pred_region
          %381 = dma.done %s374, 128
        $region48: #{tpu_custom_call.1} parent=43 // pred_fallthru
          _
        %s382 = sand.u32 %s34, 1
        %s383 = scalar_lea.sflag [#allocation9], %s382
        %s384 = sand.u32 %s82, 1
        %s385 = smul.addr %s384, 64
        %s386 = scalar_lea.vmem [#allocation8], %s385
        // Predicated region
        $region49: #{tpu_custom_call.1} parent=43 // pred_check
          %p387 = pneg %p95
        $region50: #{tpu_custom_call.1} parent=43 // pred_check_branch
          %389 = sbr.rel (%p387) target = $region52
        $region51: #{tpu_custom_call.1} parent=43 // pred_region
          %390 = dma.done %s383, 1024
        $region52: #{tpu_custom_call.1} parent=43 // pred_fallthru
          _
        %s391 = sand.u32 %s34, 1
        %s392 = scalar_lea.sflag [#allocation9], %s391
        %s393 = sand.u32 %s110, 1
        %s394 = smul.addr %s393, 64
        %s395 = scalar_lea.vmem [#allocation10], %s394
        // Predicated region
        $region53: #{tpu_custom_call.1} parent=43 // pred_check
          %p396 = pneg %p123
        $region54: #{tpu_custom_call.1} parent=43 // pred_check_branch
          %398 = sbr.rel (%p396) target = $region56
        $region55: #{tpu_custom_call.1} parent=43 // pred_region
          %399 = dma.done %s392, 1024
        $region56: #{tpu_custom_call.1} parent=43 // pred_fallthru
          _
        %s400 = sand.u32 %s188, 1
        %s401 = scalar_lea.sflag [#allocation12], %s400
        %s402 = sand.u32 %s188, 1
        %s403 = smul.addr %s402, 8
        %s404 = scalar_lea.vmem [#allocation11], %s403
        // Predicated region
        $region57: #{tpu_custom_call.1} parent=43 // pred_check
          %p405 = pneg %p201
        $region58: #{tpu_custom_call.1} parent=43 // pred_check_branch
          %407 = sbr.rel (%p405) target = $region60
        $region59: #{tpu_custom_call.1} parent=43 // pred_region
          %408 = dma.done %s401, 128
        $region60: #{tpu_custom_call.1} parent=43 // pred_fallthru
          _
        %s409 = sand.u32 %s54, 1
        %s410 = scalar_lea.sflag [#allocation6], %s409
        %s411 = sand.u32 %s54, 1
        %s412 = smul.addr %s411, 8
        %s413 = scalar_lea.vmem [#allocation5], %s412
        %p414 = pneg %p67
        %p415 = pneg %p64
        %s416 = sand.u32 %s34, 1
        %s417 = scalar_lea.sflag [#allocation9], %s416
        %s418 = sand.u32 %s82, 1
        %s419 = smul.addr %s418, 64
        %s420 = scalar_lea.vmem [#allocation8], %s419
        %p421 = pneg %p95
        %p422 = pneg %p92
        %s423 = sand.u32 %s34, 1
        %s424 = scalar_lea.sflag [#allocation9], %s423
        %s425 = sand.u32 %s110, 1
        %s426 = smul.addr %s425, 64
        %s427 = scalar_lea.vmem [#allocation10], %s426
        %p428 = pneg %p123
        %p429 = pneg %p120
        %p430 = scmp.lt.s32.totalorder %s38, 2
        %s431 = scalar_select %p430, %s38, 2
        %s432 = scalar_lea.vmem %s3, %s431
        %p433 = pneg %p149
        %p434 = pneg %p146
        %p435 = scmp.lt.s32.totalorder %s38, 2
        %s436 = scalar_select %p435, %s38, 2
        %s437 = scalar_lea.vmem %s4, %s436
        %p438 = pneg %p175
        %p439 = pneg %p172
        %s440 = sand.u32 %s188, 1
        %s441 = scalar_lea.sflag [#allocation12], %s440
        %s442 = sand.u32 %s188, 1
        %s443 = smul.addr %s442, 8
        %s444 = scalar_lea.vmem [#allocation11], %s443
        %p445 = pneg %p201
        %p446 = pneg %p198
        %p447 = pneg %p227
        %p448 = pneg %p224
        %s449 = sand.u32 %s214, 1
        %s450 = scalar_lea.sflag [#allocation7], %s449
        %s451 = sand.u32 %s214, 1
        %s452 = smul.addr %s451, 8
        %s453 = scalar_lea.vmem [#allocation13], %s452
        %p454 = pneg %p253
        %p455 = pneg %p250
        %s456 = sand.u32 %s240, 1
        %s457 = scalar_lea.sflag [#allocation15], %s456
        %s458 = sand.u32 %s240, 1
        %s459 = scalar_lea.vmem [#allocation14], %s458
        %s460 = smul.u32 16, %s39
        %s461 = smul.u32 16, %s39
        %p462 = scmp.lt.s32.totalorder %s38, 2
        %s463 = scalar_select %p462, %s38, 2
        %s464 = scalar_lea.vmem %s3, %s463
        %p465 = scmp.lt.s32.totalorder %s38, 2
        %s466 = scalar_select %p465, %s38, 2
        %s467 = scalar_lea.vmem %s4, %s466
        %p468 = scmp.eq.s32.totalorder %s39, 0
        // Predicated region
        $region61: #{tpu_custom_call.1} parent=43 // pred_check
          %p469 = pneg %p468
        $region62: #{tpu_custom_call.1} parent=43 // pred_check_branch
          %471 = sbr.rel (%p469) target = $region64
        $region63: #{tpu_custom_call.1} parent=43 // pred_region
          %472 = vst [vmem:[#allocation2] sm:$0xff] 0.0
          %473 = vst [vmem:[#allocation3] sm:$0xff] 0.0
          %vm474 = vcmask 7168
          %475 = vst.msk [vmem:[#allocation4] sm:$0xff] %vm474, 0.0
        $region64: #{tpu_custom_call.1} parent=43 // pred_fallthru
          _
        %v476 = vld [vmem:[%s377] sm:$0xff]
        %v477 = vmul.f32 %v476, %v476
        %v478 = vld [vmem:[%s386] sm:$0xf]
        %v479 = vld [vmem:[%s386 + $0x4] sm:$0xf]
        %v480 = vld [vmem:[%s386 + $0x8] sm:$0xf]
        %v481 = vld [vmem:[%s386 + $0xc] sm:$0xf]
        %v482 = vld [vmem:[%s386 + $0x10] sm:$0xf]
        %v483 = vld [vmem:[%s386 + $0x14] sm:$0xf]
        %v484 = vld [vmem:[%s386 + $0x18] sm:$0xf]
        %v485 = vld [vmem:[%s386 + $0x1c] sm:$0xf]
        %v486 = vld [vmem:[%s386 + $0x20] sm:$0xf]
        %v487 = vld [vmem:[%s386 + $0x24] sm:$0xf]
        %v488 = vld [vmem:[%s386 + $0x28] sm:$0xf]
        %v489 = vld [vmem:[%s386 + $0x2c] sm:$0xf]
        %v490 = vld [vmem:[%s386 + $0x30] sm:$0xf]
        %v491 = vld [vmem:[%s386 + $0x34] sm:$0xf]
        %v492 = vld [vmem:[%s386 + $0x38] sm:$0xf]
        %v493 = vld [vmem:[%s386 + $0x3c] sm:$0xf]
        %v494 = vunpack.c.l.bf16 %v478
        %v495 = vunpack.c.l.bf16 %v479
        %v496 = vunpack.c.l.bf16 %v480
        %v497 = vunpack.c.l.bf16 %v481
        %v498 = vunpack.c.l.bf16 %v482
        %v499 = vunpack.c.l.bf16 %v483
        %v500 = vunpack.c.l.bf16 %v484
        %v501 = vunpack.c.l.bf16 %v485
        %v502 = vunpack.c.l.bf16 %v486
        %v503 = vunpack.c.l.bf16 %v487
        %v504 = vunpack.c.l.bf16 %v488
        %v505 = vunpack.c.l.bf16 %v489
        %v506 = vunpack.c.l.bf16 %v490
        %v507 = vunpack.c.l.bf16 %v491
        %v508 = vunpack.c.l.bf16 %v492
        %v509 = vunpack.c.l.bf16 %v493
        %v510 = vld [vmem:[%s395] sm:$0xf]
        %v511 = vld [vmem:[%s395 + $0x4] sm:$0xf]
        %v512 = vld [vmem:[%s395 + $0x8] sm:$0xf]
        %v513 = vld [vmem:[%s395 + $0xc] sm:$0xf]
        %v514 = vld [vmem:[%s395 + $0x10] sm:$0xf]
        %v515 = vld [vmem:[%s395 + $0x14] sm:$0xf]
        %v516 = vld [vmem:[%s395 + $0x18] sm:$0xf]
        %v517 = vld [vmem:[%s395 + $0x1c] sm:$0xf]
        %v518 = vld [vmem:[%s395 + $0x20] sm:$0xf]
        %v519 = vld [vmem:[%s395 + $0x24] sm:$0xf]
        %v520 = vld [vmem:[%s395 + $0x28] sm:$0xf]
        %v521 = vld [vmem:[%s395 + $0x2c] sm:$0xf]
        %v522 = vld [vmem:[%s395 + $0x30] sm:$0xf]
        %v523 = vld [vmem:[%s395 + $0x34] sm:$0xf]
        %v524 = vld [vmem:[%s395 + $0x38] sm:$0xf]
        %v525 = vld [vmem:[%s395 + $0x3c] sm:$0xf]
        %v526 = vunpack.c.l.bf16 %v510
        %v527 = vunpack.c.l.bf16 %v511
        %v528 = vunpack.c.l.bf16 %v512
        %v529 = vunpack.c.l.bf16 %v513
        %v530 = vunpack.c.l.bf16 %v514
        %v531 = vunpack.c.l.bf16 %v515
        %v532 = vunpack.c.l.bf16 %v516
        %v533 = vunpack.c.l.bf16 %v517
        %v534 = vunpack.c.l.bf16 %v518
        %v535 = vunpack.c.l.bf16 %v519
        %v536 = vunpack.c.l.bf16 %v520
        %v537 = vunpack.c.l.bf16 %v521
        %v538 = vunpack.c.l.bf16 %v522
        %v539 = vunpack.c.l.bf16 %v523
        %v540 = vunpack.c.l.bf16 %v524
        %v541 = vunpack.c.l.bf16 %v525
        %v542 = vmax.f32 %v526, 0.0
        %v543 = vmax.f32 %v527, 0.0
        %v544 = vmax.f32 %v528, 0.0
        %v545 = vmax.f32 %v529, 0.0
        %v546 = vmax.f32 %v530, 0.0
        %v547 = vmax.f32 %v531, 0.0
        %v548 = vmax.f32 %v532, 0.0
        %v549 = vmax.f32 %v533, 0.0
        %v550 = vmax.f32 %v534, 0.0
        %v551 = vmax.f32 %v535, 0.0
        %v552 = vmax.f32 %v536, 0.0
        %v553 = vmax.f32 %v537, 0.0
        %v554 = vmax.f32 %v538, 0.0
        %v555 = vmax.f32 %v539, 0.0
        %v556 = vmax.f32 %v540, 0.0
        %v557 = vmax.f32 %v541, 0.0
        %v558 = vand.u32 2147483647, %v526
        %v559 = vand.u32 2147483647, %v527
        %v560 = vand.u32 2147483647, %v528
        %v561 = vand.u32 2147483647, %v529
        %v562 = vand.u32 2147483647, %v530
        %v563 = vand.u32 2147483647, %v531
        %v564 = vand.u32 2147483647, %v532
        %v565 = vand.u32 2147483647, %v533
        %v566 = vand.u32 2147483647, %v534
        %v567 = vand.u32 2147483647, %v535
        %v568 = vand.u32 2147483647, %v536
        %v569 = vand.u32 2147483647, %v537
        %v570 = vand.u32 2147483647, %v538
        %v571 = vand.u32 2147483647, %v539
        %v572 = vand.u32 2147483647, %v540
        %v573 = vand.u32 2147483647, %v541
        %v574 = vsub.f32 0.0, %v558
        %v575 = vsub.f32 0.0, %v559
        %v576 = vsub.f32 0.0, %v560
        %v577 = vsub.f32 0.0, %v561
        %v578 = vsub.f32 0.0, %v562
        %v579 = vsub.f32 0.0, %v563
        %v580 = vsub.f32 0.0, %v564
        %v581 = vsub.f32 0.0, %v565
        %v582 = vsub.f32 0.0, %v566
        %v583 = vsub.f32 0.0, %v567
        %v584 = vsub.f32 0.0, %v568
        %v585 = vsub.f32 0.0, %v569
        %v586 = vsub.f32 0.0, %v570
        %v587 = vsub.f32 0.0, %v571
        %v588 = vsub.f32 0.0, %v572
        %v589 = vsub.f32 0.0, %v573
        %v590 = vmul.f32 %v574, 1.442695
        %v591 = vpow.pop %v590
        %v592 = vmul.f32 %v575, 1.442695
        %v593 = vpow.pop %v592
        %v594 = vmul.f32 %v576, 1.442695
        %v595 = vpow.pop %v594
        %v596 = vmul.f32 %v577, 1.442695
        %v597 = vpow.pop %v596
        %v598 = vmul.f32 %v578, 1.442695
        %v599 = vpow.pop %v598
        %v600 = vmul.f32 %v579, 1.442695
        %v601 = vpow.pop %v600
        %v602 = vmul.f32 %v580, 1.442695
        %v603 = vpow.pop %v602
        %v604 = vmul.f32 %v581, 1.442695
        %v605 = vpow.pop %v604
        %v606 = vmul.f32 %v582, 1.442695
        %v607 = vpow.pop %v606
        %v608 = vmul.f32 %v583, 1.442695
        %v609 = vpow.pop %v608
        %v610 = vmul.f32 %v584, 1.442695
        %v611 = vpow.pop %v610
        %v612 = vmul.f32 %v585, 1.442695
        %v613 = vpow.pop %v612
        %v614 = vmul.f32 %v586, 1.442695
        %v615 = vpow.pop %v614
        %v616 = vmul.f32 %v587, 1.442695
        %v617 = vpow.pop %v616
        %v618 = vmul.f32 %v588, 1.442695
        %v619 = vpow.pop %v618
        %v620 = vmul.f32 %v589, 1.442695
        %v621 = vpow.pop %v620
        %v622 = vadd.f32 %v591, 1.0
        %v623 = vadd.f32 %v593, 1.0
        %v624 = vadd.f32 %v595, 1.0
        %v625 = vadd.f32 %v597, 1.0
        %v626 = vadd.f32 %v599, 1.0
        %v627 = vadd.f32 %v601, 1.0
        %v628 = vadd.f32 %v603, 1.0
        %v629 = vadd.f32 %v605, 1.0
        %v630 = vadd.f32 %v607, 1.0
        %v631 = vadd.f32 %v609, 1.0
        %v632 = vadd.f32 %v611, 1.0
        %v633 = vadd.f32 %v613, 1.0
        %v634 = vadd.f32 %v615, 1.0
        %v635 = vadd.f32 %v617, 1.0
        %v636 = vadd.f32 %v619, 1.0
        %v637 = vadd.f32 %v621, 1.0
        %v638 = vlog2.pop %v622
        %v639 = vmul.f32 %v638, 0.6931472
        %v640 = vlog2.pop %v623
        %v641 = vmul.f32 %v640, 0.6931472
        %v642 = vlog2.pop %v624
        %v643 = vmul.f32 %v642, 0.6931472
        %v644 = vlog2.pop %v625
        %v645 = vmul.f32 %v644, 0.6931472
        %v646 = vlog2.pop %v626
        %v647 = vmul.f32 %v646, 0.6931472
        %v648 = vlog2.pop %v627
        %v649 = vmul.f32 %v648, 0.6931472
        %v650 = vlog2.pop %v628
        %v651 = vmul.f32 %v650, 0.6931472
        %v652 = vlog2.pop %v629
        %v653 = vmul.f32 %v652, 0.6931472
        %v654 = vlog2.pop %v630
        %v655 = vmul.f32 %v654, 0.6931472
        %v656 = vlog2.pop %v631
        %v657 = vmul.f32 %v656, 0.6931472
        %v658 = vlog2.pop %v632
        %v659 = vmul.f32 %v658, 0.6931472
        %v660 = vlog2.pop %v633
        %v661 = vmul.f32 %v660, 0.6931472
        %v662 = vlog2.pop %v634
        %v663 = vmul.f32 %v662, 0.6931472
        %v664 = vlog2.pop %v635
        %v665 = vmul.f32 %v664, 0.6931472
        %v666 = vlog2.pop %v636
        %v667 = vmul.f32 %v666, 0.6931472
        %v668 = vlog2.pop %v637
        %v669 = vmul.f32 %v668, 0.6931472
        %v670 = vadd.f32 %v542, %v639
        %v671 = vadd.f32 %v543, %v641
        %v672 = vadd.f32 %v544, %v643
        %v673 = vadd.f32 %v545, %v645
        %v674 = vadd.f32 %v546, %v647
        %v675 = vadd.f32 %v547, %v649
        %v676 = vadd.f32 %v548, %v651
        %v677 = vadd.f32 %v549, %v653
        %v678 = vadd.f32 %v550, %v655
        %v679 = vadd.f32 %v551, %v657
        %v680 = vadd.f32 %v552, %v659
        %v681 = vadd.f32 %v553, %v661
        %v682 = vadd.f32 %v554, %v663
        %v683 = vadd.f32 %v555, %v665
        %v684 = vadd.f32 %v556, %v667
        %v685 = vadd.f32 %v557, %v669
        %v686 = vmul.f32 %v670, %v670
        %v687 = vmul.f32 %v671, %v671
        %v688 = vmul.f32 %v672, %v672
        %v689 = vmul.f32 %v673, %v673
        %v690 = vmul.f32 %v674, %v674
        %v691 = vmul.f32 %v675, %v675
        %v692 = vmul.f32 %v676, %v676
        %v693 = vmul.f32 %v677, %v677
        %v694 = vmul.f32 %v678, %v678
        %v695 = vmul.f32 %v679, %v679
        %v696 = vmul.f32 %v680, %v680
        %v697 = vmul.f32 %v681, %v681
        %v698 = vmul.f32 %v682, %v682
        %v699 = vmul.f32 %v683, %v683
        %v700 = vmul.f32 %v684, %v684
        %v701 = vmul.f32 %v685, %v685
        %v702 = vld [vmem:[#allocation2] sm:$0xff]
        %703 = vmatprep.subr.mxu0 0.0
        %704 = vmatpush1.msra.mxu0 %v494
        %705 = vmatprep.subr.mxu0 0.0
        %706 = vmatpush1.msra.mxu0 %v495
        %707 = vmatprep.subr.mxu0 0.0
        %708 = vmatpush1.msra.mxu0 %v496
        %709 = vmatprep.subr.mxu0 0.0
        %710 = vmatpush1.msra.mxu0 %v497
        %711 = vmatprep.subr.mxu0 0.0
        %712 = vmatpush1.msra.mxu0 %v498
        %713 = vmatprep.subr.mxu0 0.0
        %714 = vmatpush1.msra.mxu0 %v499
        %715 = vmatprep.subr.mxu0 0.0
        %716 = vmatpush1.msra.mxu0 %v500
        %717 = vmatprep.subr.mxu0 0.0
        %718 = vmatpush1.msra.mxu0 %v501
        %719 = vmatprep.subr.mxu0 0.0
        %720 = vmatpush1.msra.mxu0 %v502
        %721 = vmatprep.subr.mxu0 0.0
        %722 = vmatpush1.msra.mxu0 %v503
        %723 = vmatprep.subr.mxu0 0.0
        %724 = vmatpush1.msra.mxu0 %v504
        %725 = vmatprep.subr.mxu0 0.0
        %726 = vmatpush1.msra.mxu0 %v505
        %727 = vmatprep.subr.mxu0 0.0
        %728 = vmatpush1.msra.mxu0 %v506
        %729 = vmatprep.subr.mxu0 0.0
        %730 = vmatpush1.msra.mxu0 %v507
        %731 = vmatprep.subr.mxu0 0.0
        %732 = vmatpush1.msra.mxu0 %v508
        %733 = vmatprep.subr.mxu0 0.0
        %734 = vmatpush1.msra.mxu0 %v509
        %735 = vmatprep.subr.mxu0 0.0
        %736 = vmatpush1.msra.mxu0 0.0
        %737 = vmatprep.subr.mxu0 0.0
        %738 = vmatpush1.msra.mxu0 0.0
        %739 = vmatprep.subr.mxu0 0.0
        %740 = vmatpush1.msra.mxu0 0.0
        %741 = vmatprep.subr.mxu0 0.0
        %742 = vmatpush1.msra.mxu0 0.0
        %743 = vmatprep.subr.mxu0 0.0
        %744 = vmatpush1.msra.mxu0 0.0
        %745 = vmatprep.subr.mxu0 0.0
        %746 = vmatpush1.msra.mxu0 0.0
        %747 = vmatprep.subr.mxu0 0.0
        %748 = vmatpush1.msra.mxu0 0.0
        %749 = vmatprep.subr.mxu0 0.0
        %750 = vmatpush1.msra.mxu0 0.0
        %751 = vmatprep.subr.mxu0 0.0
        %752 = vmatpush1.msra.mxu0 0.0
        %753 = vmatprep.subr.mxu0 0.0
        %754 = vmatpush1.msra.mxu0 0.0
        %755 = vmatprep.subr.mxu0 0.0
        %756 = vmatpush1.msra.mxu0 0.0
        %757 = vmatprep.subr.mxu0 0.0
        %758 = vmatpush1.msra.mxu0 0.0
        %759 = vmatprep.subr.mxu0 0.0
        %760 = vmatpush1.msra.mxu0 0.0
        %761 = vmatprep.subr.mxu0 0.0
        %762 = vmatpush1.msra.mxu0 0.0
        %763 = vmatprep.subr.mxu0 0.0
        %764 = vmatpush1.msra.mxu0 0.0
        %765 = vmatprep.subr.mxu0 0.0
        %766 = vmatpush1.msra.mxu0 0.0
        %767 = vmatprep.mubr.f32.mxu0 0.0
        %768 = vmatmul.mubr.f32.gmra.mrb[0].mxu0 %v476
        %v769 = vpop.f32.mrb[0].mxu0
        %v770 = vadd.f32 0.0, %v769
        %v771 = vpop.f32.mrb[0].mxu0
        %772 = vdwg.mxu0
        %v773 = vadd.f32 %v702, %v770
        %774 = vst [vmem:[#allocation2] sm:$0xff] %v773
        %v775 = vld [vmem:[#allocation3] sm:$0xff]
        %776 = vmatprep.subr.mxu0 0.0
        %777 = vmatpush1.msra.mxu0 %v686
        %778 = vmatprep.subr.mxu0 0.0
        %779 = vmatpush1.msra.mxu0 %v687
        %780 = vmatprep.subr.mxu0 0.0
        %781 = vmatpush1.msra.mxu0 %v688
        %782 = vmatprep.subr.mxu0 0.0
        %783 = vmatpush1.msra.mxu0 %v689
        %784 = vmatprep.subr.mxu0 0.0
        %785 = vmatpush1.msra.mxu0 %v690
        %786 = vmatprep.subr.mxu0 0.0
        %787 = vmatpush1.msra.mxu0 %v691
        %788 = vmatprep.subr.mxu0 0.0
        %789 = vmatpush1.msra.mxu0 %v692
        %790 = vmatprep.subr.mxu0 0.0
        %791 = vmatpush1.msra.mxu0 %v693
        %792 = vmatprep.subr.mxu0 0.0
        %793 = vmatpush1.msra.mxu0 %v694
        %794 = vmatprep.subr.mxu0 0.0
        %795 = vmatpush1.msra.mxu0 %v695
        %796 = vmatprep.subr.mxu0 0.0
        %797 = vmatpush1.msra.mxu0 %v696
        %798 = vmatprep.subr.mxu0 0.0
        %799 = vmatpush1.msra.mxu0 %v697
        %800 = vmatprep.subr.mxu0 0.0
        %801 = vmatpush1.msra.mxu0 %v698
        %802 = vmatprep.subr.mxu0 0.0
        %803 = vmatpush1.msra.mxu0 %v699
        %804 = vmatprep.subr.mxu0 0.0
        %805 = vmatpush1.msra.mxu0 %v700
        %806 = vmatprep.subr.mxu0 0.0
        %807 = vmatpush1.msra.mxu0 %v701
        %808 = vmatprep.subr.mxu0 0.0
        %809 = vmatpush1.msra.mxu0 0.0
        %810 = vmatprep.subr.mxu0 0.0
        %811 = vmatpush1.msra.mxu0 0.0
        %812 = vmatprep.subr.mxu0 0.0
        %813 = vmatpush1.msra.mxu0 0.0
        %814 = vmatprep.subr.mxu0 0.0
        %815 = vmatpush1.msra.mxu0 0.0
        %816 = vmatprep.subr.mxu0 0.0
        %817 = vmatpush1.msra.mxu0 0.0
        %818 = vmatprep.subr.mxu0 0.0
        %819 = vmatpush1.msra.mxu0 0.0
        %820 = vmatprep.subr.mxu0 0.0
        %821 = vmatpush1.msra.mxu0 0.0
        %822 = vmatprep.subr.mxu0 0.0
        %823 = vmatpush1.msra.mxu0 0.0
        %824 = vmatprep.subr.mxu0 0.0
        %825 = vmatpush1.msra.mxu0 0.0
        %826 = vmatprep.subr.mxu0 0.0
        %827 = vmatpush1.msra.mxu0 0.0
        %828 = vmatprep.subr.mxu0 0.0
        %829 = vmatpush1.msra.mxu0 0.0
        %830 = vmatprep.subr.mxu0 0.0
        %831 = vmatpush1.msra.mxu0 0.0
        %832 = vmatprep.subr.mxu0 0.0
        %833 = vmatpush1.msra.mxu0 0.0
        %834 = vmatprep.subr.mxu0 0.0
        %835 = vmatpush1.msra.mxu0 0.0
        %836 = vmatprep.subr.mxu0 0.0
        %837 = vmatpush1.msra.mxu0 0.0
        %838 = vmatprep.subr.mxu0 0.0
        %839 = vmatpush1.msra.mxu0 0.0
        %840 = vmatprep.mubr.f32.mxu0 0.0
        %841 = vmatmul.mubr.f32.gmra.mrb[0].mxu0 %v477
        %v842 = vpop.f32.mrb[0].mxu0
        %v843 = vadd.f32 0.0, %v842
        %v844 = vpop.f32.mrb[0].mxu0
        %845 = vdwg.mxu0
        %v846 = vadd.f32 %v775, %v843
        %847 = vst [vmem:[#allocation3] sm:$0xff] %v846
        %v848 = vld [vmem:[#allocation4] sm:$0xff]
        %849 = vadd.xlane.f32.xlu0 %v477
        %v850 = vpop.xlane.xlu0 %849
        %v851 = vadd.f32 %v848, %v850
        %vm852 = vcmask 7168
        %853 = vst.msk [vmem:[#allocation4] sm:$0xff] %vm852, %v851
        %p854 = scmp.eq.s32.totalorder %s39, 1
        // Predicated region
        $region65: #{tpu_custom_call.1} parent=43 // pred_check
          %p855 = pneg %p854
        $region66: #{tpu_custom_call.1} parent=43 // pred_check_branch
          %857 = sbr.rel (%p855) target = $region68
        $region67: #{tpu_custom_call.1} parent=43 // pred_region
          %v858 = vld [vmem:[%s467] sm:$0x1]
          %v859 = vmax.f32 %v858, 0.0
          %v860 = vand.u32 2147483647, %v858
          %v861 = vsub.f32 0.0, %v860
          %v862 = vmul.f32 %v861, 1.442695
          %v863 = vpow.pop %v862
          %v864 = vadd.f32 %v863, 1.0
          %v865 = vlog2.pop %v864
          %v866 = vmul.f32 %v865, 0.6931472
          %v867 = vadd.f32 %v859, %v866
          %v868 = vmul.f32 %v867, %v867
          %v869 = vld [vmem:[#allocation2] sm:$0xff]
          %v870 = vld [vmem:[%s464] sm:$0x1]
          %v872 = vlaneseq
          %v873 = vshrl.u32 %v872, 7
          %v874 = vsub.s32 0, %v873
          %v875 = vrot.slane %v870, %v874
          %v877 = vadd.f32 %v869, %v875
          %v878 = vld [vmem:[#allocation3] sm:$0xff]
          %v880 = vlaneseq
          %v881 = vshrl.u32 %v880, 7
          %v882 = vsub.s32 0, %v881
          %v883 = vrot.slane %v868, %v882
          %v885 = vadd.f32 %v878, %v883
          %v886 = vrsqrt.pop %v885
          %v887 = vmul.f32 %v885, %v886
          %vm888 = vcmp.eq.f32.partialorder %v885, inf
          %v889 = vsel %vm888, %v885, %v887
          %vm890 = vcmp.eq.f32.partialorder %v885, 0.0
          %v891 = vand.u32 %v885, 2147483648
          %v892 = vsel %vm890, %v891, %v889
          %v893 = vld [vmem:[#allocation4] sm:$0xff]
          %v894 = vmul.f32 %v893, 0.0023607307
          %v895 = vadd.f32 %v894, 0.0023607307
          %v896 = vrcp.pop %v895
          %v897 = vlog2.pop %v895
          %v898 = vmul.f32 %v897, 0.6931472
          %v899 = vlog2.pop %v885
          %v900 = vmul.f32 %v899, 0.6931472
          %902 = vset.pattern.permute.xlu0 0
          %903 = vperm.xlu0 %902, %v898
          %v904 = vpop.permute.xlu0 %903
          %v906 = vsub.f32 %v904, %v900
          %v907 = vld [vmem:[%s404] sm:$0xff]
          %v908 = vmul.f32 %v892, %v907
          %v909 = vadd.f32 %v877, %v908
          %v910 = vmax.f32 %v909, 0.0
          %911 = vst [vmem:[%s453] sm:$0xff] %v910
          %v912 = vmul.f32 %v907, %v907
          %v913 = vsub.f32 %v906, %v912
          %v914 = vmul.f32 %v885, %v912
          %916 = vset.pattern.permute.xlu0 0
          %917 = vperm.xlu0 %916, %v896
          %v918 = vpop.permute.xlu0 %917
          %v920 = vmul.f32 %v914, %v918
          %v921 = vadd.f32 %v913, %v920
          %v922 = vmul.f32 %v921, 0.5
          %923 = vadd.xlane.f32.xlu0 %v922
          %v924 = vpop.xlane.xlu0 %923
          %v925 = vrot.slane %v924, 4
          %v926 = vadd.f32 %v924, %v925
          %v927 = vrot.slane %v926, 2
          %v928 = vadd.f32 %v926, %v927
          %v929 = vrot.slane %v928, 1
          %v930 = vadd.f32 %v928, %v929
          %s931 = vtos %v930
          %v932 = vstv %s931
          %933 = vst [vmem:[%s459] sm:$0x1] %v932
        $region68: #{tpu_custom_call.1} parent=43 // pred_fallthru
          _
        %s934 = sand.u32 %s214, 1
        %s935 = scalar_lea.sflag [#allocation7], %s934
        %s936 = sand.u32 %s214, 1
        %s937 = smul.addr %s936, 8
        %s938 = scalar_lea.vmem [#allocation13], %s937
        %s939 = sand.u32 %s240, 1
        %s940 = scalar_lea.sflag [#allocation15], %s939
        %s941 = sand.u32 %s240, 1
        %s942 = scalar_lea.vmem [#allocation14], %s941
        // Predicated region
        $region69: #{tpu_custom_call.1} parent=43 // pred_check
          %p943 = pneg %p224
        $region70: #{tpu_custom_call.1} parent=43 // pred_check_branch
          %945 = sbr.rel (%p943) target = $region72
        $region71: #{tpu_custom_call.1} parent=43 // pred_region
          %s947 = ssub.s32 128, 128
          %948 = vsyncadd %s935, %s947
          %s949 = smul.addr %s38, 128
          %s950 = scalar_lea.hbm %s6, %s949
          %s952 = sshll.u32 %s938, 4
          %s953 = int_to_ptr.vmem [resolvable:$true] %s952
          %955 = dma.vmem_to_hbm [thread:$0]  %s953, 128, %s950, %s935
        $region72: #{tpu_custom_call.1} parent=43 // pred_fallthru
          _
        // Predicated region
        $region73: #{tpu_custom_call.1} parent=43 // pred_check
          %p956 = pneg %p250
        $region74: #{tpu_custom_call.1} parent=43 // pred_check_branch
          %958 = sbr.rel (%p956) target = $region76
        $region75: #{tpu_custom_call.1} parent=43 // pred_region
          %s960 = ssub.s32 16, 16
          %961 = vsyncadd %s940, %s960
          %s962 = smul.addr %s38, 16
          %s963 = scalar_lea.hbm %s7, %s962
          %s965 = sshll.u32 %s942, 4
          %s966 = int_to_ptr.vmem [resolvable:$true] %s965
          %968 = dma.vmem_to_hbm [thread:$0]  %s966, 16, %s963, %s940
        $region76: #{tpu_custom_call.1} parent=43 // pred_fallthru
          _
      $region44: #{tpu_custom_call.1} parent=5 // pred_fallthru
        _
      %p969 = scmp.le.s32.totalorder 2, %s29
      // Predicated region
      $region77: #{tpu_custom_call.1} parent=5 // pred_check
        %p970 = pneg %p969
      $region78: #{tpu_custom_call.1} parent=5 // pred_check_branch
        %972 = sbr.rel (%p970) target = $region80
      $region79: #{tpu_custom_call.1} parent=5 // pred_region
        %s973 = ssub.s32 %s29, 2
        // Predicated region
        $region81: #{tpu_custom_call.1} parent=79 // pred_check
          %p974 = pneg %p230
        $region82: #{tpu_custom_call.1} parent=79 // pred_check_branch
          %976 = sbr.rel (%p974) target = $region84
        $region83: #{tpu_custom_call.1} parent=79 // pred_region
          %s977 = sand.u32 %s215, 1
          %s978 = scalar_lea.sflag [#allocation7], %s977
          %s979 = sand.u32 %s215, 1
          %s980 = smul.addr %s979, 8
          %s981 = scalar_lea.vmem [#allocation13], %s980
          %982 = dma.done %s978, 128
        $region84: #{tpu_custom_call.1} parent=79 // pred_fallthru
          _
        // Predicated region
        $region85: #{tpu_custom_call.1} parent=79 // pred_check
          %p983 = pneg %p256
        $region86: #{tpu_custom_call.1} parent=79 // pred_check_branch
          %985 = sbr.rel (%p983) target = $region88
        $region87: #{tpu_custom_call.1} parent=79 // pred_region
          %s986 = sand.u32 %s241, 1
          %s987 = scalar_lea.sflag [#allocation15], %s986
          %s988 = sand.u32 %s241, 1
          %s989 = scalar_lea.vmem [#allocation14], %s988
          %990 = dma.done %s987, 16
        $region88: #{tpu_custom_call.1} parent=79 // pred_fallthru
          _
      $region80: #{tpu_custom_call.1} parent=5 // pred_fallthru
        _
    $region6: #{tpu_custom_call.1} parent=1 // loop_footer
      %s33 = sadd.s32 1, %s29
    $region7: #{tpu_custom_call.1} parent=1 // loop_footer_branch
      %28 = sbr.rel target = $region3
    $region8: #{tpu_custom_call.1} parent=1 // loop_exit
      _
    %991 = vsyncpa [#allocation6], 1
    %s992 = scalar_lea.sflag [#allocation6], 1
    %993 = vsyncpa %s992, 1
    %994 = vsyncpa [#allocation9], 1
    %s995 = scalar_lea.sflag [#allocation9], 1
    %996 = vsyncpa %s995, 1
    %997 = vsyncpa [#allocation12], 1
    %s998 = scalar_lea.sflag [#allocation12], 1
    %999 = vsyncpa %s998, 1
    %1000 = vsyncpa [#allocation7], 1
    %s1001 = scalar_lea.sflag [#allocation7], 1
    %1002 = vsyncpa %s1001, 1
    %1003 = vsyncpa [#allocation15], 1
    %s1004 = scalar_lea.sflag [#allocation15], 1
    %1005 = vsyncpa %s1004, 1

</llo_original>
